<compile_context>
chip_gen: v7x
topology: tpu7x:2x2x1
jax: 0.10.0
libtpu: 0.0.40
codegen_flags: <defaults>
</compile_context>

<pallas_src>
import math
import functools

import jax
import jax.numpy as jnp
from jax.experimental import pallas as pl
from jax.experimental.pallas import tpu as pltpu

EPS_BN = 1e-5


# ---------------------------------------------------------------------------
# helpers
# ---------------------------------------------------------------------------
def _ceil_to(x, m):
    return ((x + m - 1) // m) * m


def _pad_dim(x, axis, target):
    if x.shape[axis] == target:
        return x
    widths = [(0, 0)] * x.ndim
    widths[axis] = (0, target - x.shape[axis])
    return jnp.pad(x, widths)


# ---------------------------------------------------------------------------
# Pallas kernel 1: tiled matmul + bias (the single fused Linear|down|skip GEMM)
# ---------------------------------------------------------------------------
def _mm_k1_kernel(x_ref, w_ref, b_ref, o_ref):
    # single-K fast path (K <= tk): no scratch accumulator
    o_ref[...] = (jnp.dot(x_ref[...], w_ref[...],
                          preferred_element_type=jnp.float32)
                  + b_ref[...]).astype(o_ref.dtype)


def _mm_kernel(x_ref, w_ref, b_ref, o_ref, acc_ref):
    k = pl.program_id(2)

    @pl.when(k == 0)
    def _():
        acc_ref[...] = jnp.zeros_like(acc_ref)

    acc_ref[...] += jnp.dot(x_ref[...], w_ref[...],
                            preferred_element_type=jnp.float32)

    @pl.when(k == pl.num_programs(2) - 1)
    def _():
        o_ref[...] = (acc_ref[...] + b_ref[...]).astype(o_ref.dtype)


def pallas_matmul_bias(x, w, b, *, tm=128, tn=256, tk=512,
                       out_dtype=jnp.bfloat16):
    """out = x @ w + b with bf16 MXU operands, f32 accumulation, bf16 output
    by default (memory-bound K=128 GEMMs -> halve HBM writeback)."""
    M, K = x.shape
    Kw, Nn = w.shape
    assert K == Kw
    tm_ = M if M <= tm else tm
    tn_ = Nn if Nn <= tn else tn
    tk_ = K if K <= tk else tk
    Mp, Np, Kp = _ceil_to(M, tm_), _ceil_to(Nn, tn_), _ceil_to(K, tk_)

    xp = _pad_dim(_pad_dim(x, 0, Mp), 1, Kp).astype(jnp.bfloat16)
    wp = _pad_dim(_pad_dim(w, 0, Kp), 1, Np).astype(jnp.bfloat16)
    bp = _pad_dim(b.reshape(1, Nn).astype(jnp.float32), 1, Np)

    mg, ng, nk = Mp // tm_, Np // tn_, Kp // tk_

    if nk == 1:
        out = pl.pallas_call(
            _mm_k1_kernel,
            out_shape=jax.ShapeDtypeStruct((Mp, Np), out_dtype),
            grid=(mg, ng),
            in_specs=[pl.BlockSpec((tm_, Kp), lambda i, j: (i, 0)),
                      pl.BlockSpec((Kp, tn_), lambda i, j: (0, j)),
                      pl.BlockSpec((1, tn_), lambda i, j: (0, j))],
            out_specs=pl.BlockSpec((tm_, tn_), lambda i, j: (i, j)),
            compiler_params=pltpu.CompilerParams(
                dimension_semantics=("parallel", "parallel")),
        )(xp, wp, bp)
    else:
        out = pl.pallas_call(
            _mm_kernel,
            out_shape=jax.ShapeDtypeStruct((Mp, Np), out_dtype),
            grid=(mg, ng, nk),
            in_specs=[pl.BlockSpec((tm_, tk_), lambda i, j, k: (i, k)),
                      pl.BlockSpec((tk_, tn_), lambda i, j, k: (k, j)),
                      pl.BlockSpec((1, tn_), lambda i, j, k: (0, j))],
            out_specs=pl.BlockSpec((tm_, tn_), lambda i, j, k: (i, j)),
            scratch_shapes=[pltpu.VMEM((tm_, tn_), jnp.float32)],
            compiler_params=pltpu.CompilerParams(
                dimension_semantics=("parallel", "parallel", "arbitrary")),
        )(xp, wp, bp)

    if Mp != M or Np != Nn:
        out = out[:M, :Nn]
    return out


# ---------------------------------------------------------------------------
# Pallas kernel 2: lane-dense graph contraction fused with relu(graph + down)
#   out[m, w, c] = relu( sum_j x[m, j, c] * a[j, w, c]  +  down[m, w, c] )
# 2-D layout (columns = joint*C + c) so every slice is a clean lane-dim slice,
# and per-w accumulators of shape (tm, C) that fit in vector registers.
# ---------------------------------------------------------------------------
def _graph_relu_kernel(x_ref, a_ref, d_ref, o_ref, *, J, C, Vb, wblk):
    # x_ref: (tm, J*C) bf16 ; a_ref: (Vb*J, C) f32 (row = w_local*J + j)
    # d_ref, o_ref: (tm, Vb*C) bf16 (column block w_local*C : (w_local+1)*C)
    tm = x_ref.shape[0]
    for w0 in range(0, Vb, wblk):
        nacc = min(wblk, Vb - w0)
        accs = [jnp.zeros((tm, C), jnp.float32) for _ in range(nacc)]
        for j in range(J):
            xj = x_ref[:, j * C:(j + 1) * C].astype(jnp.float32)
            for u in range(nacc):
                r = (w0 + u) * J + j
                accs[u] = accs[u] + xj * a_ref[r:r + 1, :]
        for u in range(nacc):
            w = w0 + u
            dwn = d_ref[:, w * C:(w + 1) * C].astype(jnp.float32)
            o_ref[:, w * C:(w + 1) * C] = jnp.maximum(
                accs[u] + dwn, 0.0).astype(o_ref.dtype)


def pallas_graph_relu(x2, a2, d2, V, *, tm=32, out_dtype=jnp.bfloat16):
    """x2: (NT, 3V*C) bf16, a2: (V*3V, C) f32 (w-major rows), d2: (NT, V*C)
    bf16  ->  (NT, V*C) bf16 = relu(graph + down)."""
    NT = x2.shape[0]
    VJ, C = a2.shape
    J = VJ // V                                   # = 3*V
    nw = 2 if V % 2 == 0 else 1                   # split w range -> >=2 steps
    Vb = V // nw
    wblk = 2 if Vb % 2 == 0 else 1
    tm_ = NT if NT <= tm else tm                  # tm=32 keeps accs in vregs
    NTp = _ceil_to(NT, tm_)
    x2p = _pad_dim(x2, 0, NTp)
    d2p = _pad_dim(d2, 0, NTp)

    kernel = functools.partial(_graph_relu_kernel, J=J, C=C, Vb=Vb, wblk=wblk)
    out = pl.pallas_call(
        kernel,
        out_shape=jax.ShapeDtypeStruct((NTp, V * C), out_dtype),
        grid=(NTp // tm_, nw),
        in_specs=[pl.BlockSpec((tm_, J * C), lambda i, wb: (i, 0)),
                  pl.BlockSpec((Vb * J, C), lambda i, wb: (wb, 0)),
                  pl.BlockSpec((tm_, Vb * C), lambda i, wb: (i, wb))],
        out_specs=pl.BlockSpec((tm_, Vb * C), lambda i, wb: (i, wb)),
        compiler_params=pltpu.CompilerParams(
            dimension_semantics=("parallel", "parallel")),
    )(x2p, a2, d2p)
    if NTp != NT:
        out = out[:NT]
    return out


# ---------------------------------------------------------------------------
# Pallas kernel 3: 9x1 stride-2 temporal conv (in-VMEM im2col -> single MXU
# matmul) fused with the final residual  relu(conv(y) + x_skip)*w1 + x*w2
# ---------------------------------------------------------------------------
def _tcn_residual_kernel(ws_ref, ye_ref, yo_ref, w9_ref, xs_ref, xr_ref,
                         o_ref, col_ref, *, Vp, T_out, C):
    rows = T_out * Vp
    # im2col scratch: column block d*C:(d+1)*C holds the (gated) input window
    # of tap d; even/odd temporal phases make every window a contiguous,
    # statically sliced, sublane-aligned block (Vp is a multiple of 16).
    for d in range(9):
        e = d // 2
        if d % 2 == 0:
            col_ref[:, d * C:(d + 1) * C] = ye_ref[0, e * Vp:e * Vp + rows, :]
        else:
            col_ref[:, d * C:(d + 1) * C] = yo_ref[0, e * Vp:e * Vp + rows, :]
    # one long-K matmul instead of 9 short ones (amortizes MXU fill/drain).
    acc = jnp.dot(col_ref[...], w9_ref[...], preferred_element_type=jnp.float32)
    w1 = ws_ref[0, 0]
    w2 = ws_ref[0, 1]
    res = (jnp.maximum(acc + xs_ref[0].astype(jnp.float32), 0.0) * w1
           + xr_ref[0] * w2)
    o_ref[0] = res.astype(o_ref.dtype)


def pallas_tcn_residual(ye, yo, w9, x_skip, x_res, w_soft, *, Vp, T_out, Cout,
                        tco=256):
    """ye/yo: (N, Te*Vp, C)/(N, To*Vp, C) bf16 gated+padded temporal phases,
    w9: (9*C, Cout) bf16, x_skip: (N, rows, Cout) bf16, x_res: (N, rows, Cout)
    f32, w_soft: (2,)  ->  (N, rows, Cout) f32."""
    N, TeVp, C = ye.shape
    ToVp = yo.shape[1]
    rows = T_out * Vp
    tco_ = Cout if Cout <= tco else tco
    assert Cout % tco_ == 0
    ws = w_soft.reshape(1, 2).astype(jnp.float32)

    kernel = functools.partial(_tcn_residual_kernel, Vp=Vp, T_out=T_out, C=C)
    # TODO(synk): for long clips (T_out*Vp in the thousands) add a row-tiling
    # grid axis so the im2col scratch + phase blocks stay inside v7x VMEM.
    return pl.pallas_call(
        kernel,
        out_shape=jax.ShapeDtypeStruct((N, rows, Cout), jnp.float32),
        grid=(Cout // tco_, N),                  # n fastest -> weights resident
        in_specs=[
            pl.BlockSpec(memory_space=pltpu.MemorySpace.SMEM),        # w_soft
            pl.BlockSpec((1, TeVp, C), lambda j, n: (n, 0, 0)),       # even phase
            pl.BlockSpec((1, ToVp, C), lambda j, n: (n, 0, 0)),       # odd phase
            pl.BlockSpec((9 * C, tco_), lambda j, n: (0, j)),         # conv weight
            pl.BlockSpec((1, rows, tco_), lambda j, n: (n, 0, j)),    # x_skip
            pl.BlockSpec((1, rows, tco_), lambda j, n: (n, 0, j)),    # x (mix)
        ],
        out_specs=pl.BlockSpec((1, rows, tco_), lambda j, n: (n, 0, j)),
        scratch_shapes=[pltpu.VMEM((rows, 9 * C), jnp.bfloat16)],
        compiler_params=pltpu.CompilerParams(
            dimension_semantics=("parallel", "parallel")),
    )(ws, ye, yo, w9, x_skip, x_res)


# ---------------------------------------------------------------------------
# Attention: gate vectors only (tiny 1-channel convs / FC layers -> XLA).
# The sequential y*sigmoid(g)+y passes are multiplicatively separable, so the
# combined gate is applied later in ONE pass instead of rewriting y 3 times.
# ---------------------------------------------------------------------------
def attention_gates(y, p):
    N, T, V, C = y.shape
    # joint (spatial) gate: Conv1d over V on the T-mean of y
    k = p["ker_jpt"]
    pad = (k - 1) // 2
    se = jnp.mean(y, axis=1, dtype=jnp.float32)                      # (N,V,C)
    sep = jnp.pad(se, ((0, 0), (pad, pad), (0, 0)))
    win = jnp.stack([sep[:, d:d + V, :] for d in range(k)], axis=2)
    sa = jnp.einsum('nvkc,ck->nv', win, p["conv_sa_w"][0]) + p["conv_sa_b"][0]
    f_sa = 1.0 + jax.nn.sigmoid(sa)                                  # (N,V)

    # temporal gate: Conv1d over T on the f_sa-weighted V-mean (== mean of y1)
    se_t = jnp.einsum('ntvc,nv->ntc', y.astype(jnp.float32), f_sa) / V
    sep = jnp.pad(se_t, ((0, 0), (4, 4), (0, 0)))
    win = jnp.stack([sep[:, d:d + T, :] for d in range(9)], axis=2)
    ta = jnp.einsum('ntkc,ck->nt', win, p["conv_ta_w"][0]) + p["conv_ta_b"][0]
    f_ta = 1.0 + jax.nn.sigmoid(ta)                                  # (N,T)

    # channel gate: FC layers on the f_ta-weighted T-mean (== mean of y2)
    se_c = jnp.einsum('ntc,nt->nc', se_t, f_ta) / T                  # (N,C)
    h = jnp.maximum(se_c @ p["fc1c_w"].T + p["fc1c_b"], 0.0)
    f_ca = 1.0 + jax.nn.sigmoid(h @ p["fc2c_w"].T + p["fc2c_b"])     # (N,C)
    return f_sa, f_ta, f_ca


# ---------------------------------------------------------------------------
# Module forward (channel-last internally)
# ---------------------------------------------------------------------------
def resblock1_forward(a, x, p):
    """ResBlock1.forward(a, x) with keep_prob=1.0 (DropBlocks are identity)."""
    N, Cin, T, V = a.shape
    Cout, G = p["Cout"], p["groups"]
    T_out = (T - 1) // 2 + 1
    s_bn = 1.0 / math.sqrt(1.0 + EPS_BN)      # BN with gamma=1, mean=0, var=1
    w_soft = jax.nn.softmax(p["w"])
    Vp = _ceil_to(V, 16)                      # sublane-aligned joints for tcn

    # single layout change at the boundary: NCHW -> channel-last.
    a_cl = jnp.transpose(a, (0, 2, 3, 1))                       # (N,T,V,Cin)
    x_rows = a_cl.reshape(N * T * V, Cin)

    # ---- ONE fused GEMM: [Linear | down | skip]  (x_rows read once)
    W_all = jnp.concatenate(
        [p["Linear_weight"], p["down_w"].T, p["skip_w"].T], axis=1) * s_bn
    b_all = jnp.concatenate(
        [p["Linear_bias"], jnp.zeros((2 * Cout,), jnp.float32)]) * s_bn
    big = pallas_matmul_bias(x_rows, W_all, b_all,
                             out_dtype=jnp.bfloat16)            # (NTV, 5*Cout)
    xl = big[:, :3 * Cout]
    down = big[:, 3 * Cout:4 * Cout]
    skip = big[:, 4 * Cout:]

    # ---- graph contraction + fused relu(graph + down)
    learn_A = jnp.tile(p["DecoupleA"], (1, Cout // G, 1, 1))    # (3,Cout,V,V)
    normA = learn_A / (learn_A.sum(axis=2, keepdims=True) + 0.001)
    normA_s = normA * (p["gcn_bn_gamma"] * s_bn)[None, :, None, None]
    # a2[w*3V + (v*3+k), c] = normA_s[k, c, v, w]  (w-major rows; stays f32
    # because of the gamma=1e-6 scaling)
    a2 = normA_s.transpose(3, 2, 0, 1).reshape(V * 3 * V, Cout)
    x2 = xl.reshape(N * T, 3 * V * Cout)        # pure reshape: col = (v,k,c)
    d2 = down.reshape(N * T, V * Cout)          # pure reshape: col = (v,c)
    y2 = pallas_graph_relu(x2, a2.astype(jnp.float32), d2, V)  # (NT, V*Cout)
    y = y2.reshape(N, T, V, Cout)                               # bf16

    # ---- attention gate vectors (pooled stats only, XLA)
    f_sa, f_ta, f_ca = attention_gates(y, p)

    # ---- single fused prep pass over y: gate * pad * phase split * bf16
    y_g = (y.astype(jnp.float32)
           * f_ta[:, :, None, None]
           * f_sa[:, None, :, None]
           * f_ca[:, None, None, :]).astype(jnp.bfloat16)
    y_g = jnp.pad(y_g, ((0, 0), (4, 4), (0, 0), (0, Vp - V)))
    ye = y_g[:, 0::2].reshape(N, -1, Cout)      # even temporal phase
    yo = y_g[:, 1::2].reshape(N, -1, Cout)      # odd temporal phase

    # residual branch: stride-2 temporal subsample of the fused skip columns
    x_skip = skip.reshape(N, T, V, Cout)[:, ::2]
    x_skip = jnp.pad(x_skip, ((0, 0), (0, 0), (0, Vp - V), (0, 0)))
    x_skip = x_skip.reshape(N, T_out * Vp, Cout)

    x_res = jnp.transpose(x, (0, 2, 3, 1))
    x_res = jnp.pad(x_res, ((0, 0), (0, 0), (0, Vp - V), (0, 0)))
    x_res = x_res.reshape(N, T_out * Vp, Cout).astype(jnp.float32)

    # tcn conv weight with BN folded: (9, C, Cout) -> (9*C, Cout)
    w9 = (p["tcn_w"].transpose(2, 1, 0) * s_bn).reshape(9 * Cout, Cout)

    out_cl = pallas_tcn_residual(ye, yo, w9.astype(jnp.bfloat16),
                                 x_skip, x_res, w_soft,
                                 Vp=Vp, T_out=T_out, Cout=Cout)
    out = out_cl.reshape(N, T_out, Vp, Cout)[:, :, :V, :]
    return jnp.transpose(out, (0, 3, 1, 2))                     # back to NCHW


# ---------------------------------------------------------------------------
# Plain-JAX f32 reference (mirrors the PyTorch ops on NCHW) for self-check
# ---------------------------------------------------------------------------
def reference_forward(a, x, p):
    N, Cin, T, V = a.shape
    Cout, G = p["Cout"], p["groups"]
    s_bn = 1.0 / math.sqrt(1.0 + EPS_BN)
    T_out = (T - 1) // 2 + 1

    learn_A = jnp.tile(p["DecoupleA"], (1, Cout // G, 1, 1))
    normA = learn_A / (learn_A.sum(axis=2, keepdims=True) + 0.001)
    xw = (jnp.einsum('nctw,cd->ndtw', a, p["Linear_weight"])
          + p["Linear_bias"][None, :, None, None]) * s_bn
    x5 = xw.reshape(N, 3, Cout, T, V)
    g = jnp.einsum('nkctv,kcvw->nctw', x5, normA)
    g = g * (p["gcn_bn_gamma"] * s_bn)[None, :, None, None]
    down = jnp.einsum('nctv,dc->ndtv', a, p["down_w"]) * s_bn
    y = jnp.maximum(g + down, 0.0)

    k = p["ker_jpt"]
    pad = (k - 1) // 2
    se = y.mean(axis=2)
    sep = jnp.pad(se, ((0, 0), (0, 0), (pad, pad)))
    win = jnp.stack([sep[:, :, d:d + V] for d in range(k)], axis=-1)
    sa = jnp.einsum('ncvk,ck->nv', win, p["conv_sa_w"][0]) + p["conv_sa_b"][0]
    y = y * jax.nn.sigmoid(sa)[:, None, None, :] + y
    se = y.mean(axis=3)
    sep = jnp.pad(se, ((0, 0), (0, 0), (4, 4)))
    win = jnp.stack([sep[:, :, d:d + T] for d in range(9)], axis=-1)
    ta = jnp.einsum('nctk,ck->nt', win, p["conv_ta_w"][0]) + p["conv_ta_b"][0]
    y = y * jax.nn.sigmoid(ta)[:, None, :, None] + y
    se = y.mean(axis=(2, 3))
    h = jnp.maximum(se @ p["fc1c_w"].T + p["fc1c_b"], 0.0)
    se2 = jax.nn.sigmoid(h @ p["fc2c_w"].T + p["fc2c_b"])
    y = y * se2[:, :, None, None] + y

    yp = jnp.pad(y, ((0, 0), (0, 0), (4, 4), (0, 0)))
    tout = jnp.stack([yp[:, :, d:d + 2 * (T_out - 1) + 1:2, :] for d in range(9)],
                     axis=-1)
    tc = jnp.einsum('nctvk,dck->ndtv', tout, p["tcn_w"]) * s_bn
    skip = jnp.einsum('nctv,dc->ndtv', a[:, :, ::2, :], p["skip_w"]) * s_bn
    w_soft = jax.nn.softmax(p["w"])
    return jnp.maximum(tc + skip, 0.0) * w_soft[0] + x * w_soft[1]


# ---------------------------------------------------------------------------
# Deterministic parameter construction (mirrors the PyTorch __init__ shapes)
# ---------------------------------------------------------------------------
def make_params(key, *, num_point, groups, Cin=128, Cout=256):
    ks = jax.random.split(key, 8)
    V = num_point
    ker_jpt = V - 1 if V % 2 == 0 else V
    A1 = jax.random.uniform(ks[0], (3, V, V), jnp.float32)
    return {
        "Cout": Cout,
        "groups": groups,
        "ker_jpt": ker_jpt,
        "w": jnp.ones((2,), jnp.float32),
        "DecoupleA": jnp.tile(A1.reshape(3, 1, V, V), (1, groups, 1, 1)),
        "Linear_weight": jax.random.normal(ks[1], (Cin, Cout * 3), jnp.float32)
                         * math.sqrt(0.5 / (Cout * 3)),
        "Linear_bias": jnp.full((Cout * 3,), 1e-6, jnp.float32),
        "gcn_bn_gamma": jnp.full((Cout,), 1e-6, jnp.float32),
        "down_w": jax.random.normal(ks[2], (Cout, Cin), jnp.float32)
                  * math.sqrt(2.0 / Cout),
        "tcn_w": jax.random.normal(ks[3], (Cout, Cout, 9), jnp.float32)
                 * math.sqrt(2.0 / (Cout * 9)),
        "skip_w": jax.random.normal(ks[4], (Cout, Cin), jnp.float32)
                  * math.sqrt(2.0 / Cout),
        "conv_sa_w": jax.random.normal(ks[5], (1, Cout, ker_jpt), jnp.float32)
                     * math.sqrt(2.0 / (Cout * ker_jpt + ker_jpt)),
        "conv_sa_b": jnp.zeros((1,), jnp.float32),
        "conv_ta_w": jnp.zeros((1, Cout, 9), jnp.float32),
        "conv_ta_b": jnp.zeros((1,), jnp.float32),
        "fc1c_w": jax.random.normal(ks[6], (Cout // 2, Cout), jnp.float32)
                  * math.sqrt(2.0 / Cout),
        "fc1c_b": jnp.zeros((Cout // 2,), jnp.float32),
        "fc2c_w": jnp.zeros((Cout, Cout // 2), jnp.float32),
        "fc2c_b": jnp.zeros((Cout,), jnp.float32),
    }


# ---------------------------------------------------------------------------
if __name__ == "__main__":
    N, Cin, Cout = 2, 128, 256
    T, V, groups = 8, 16, 8
    T_out = (T - 1) // 2 + 1                      # temporal stride 2 -> 4

    key = jax.random.PRNGKey(0)
    kp, ka, kx = jax.random.split(key, 3)
    params = make_params(kp, num_point=V, groups=groups, Cin=Cin, Cout=Cout)

    a = jax.random.normal(ka, (N, Cin, T, V), jnp.float32)       # unit input
    x = jax.random.normal(kx, (N, Cout, T_out, V), jnp.float32)  # mix input

    out = resblock1_forward(a, x, params)
    jax.block_until_ready(out)
    assert out.shape == (N, Cout, T_out, V)

    # self-check vs plain-JAX f32 reference (bf16 MXU operands / intermediates)
    ref = reference_forward(a, x, params)
    rel = float(jnp.max(jnp.abs(out - ref)) / (jnp.max(jnp.abs(ref)) + 1e-6))
    assert rel < 5e-2, f"mismatch vs reference: rel={rel}"

    print("KERNEL_OK")
</pallas_src>

<mosaic_0001>
module attributes {stable_mosaic.version = 11 : i64} {
  func.func @_mm_k1_kernel(%arg0: i32, %arg1: i32, %arg2: memref<128x128xbf16, #tpu.memory_space<vmem>>, %arg3: memref<128x256xbf16, #tpu.memory_space<vmem>>, %arg4: memref<1x256xf32, #tpu.memory_space<vmem>>, %arg5: memref<128x256xbf16, #tpu.memory_space<vmem>>) attributes {dimension_semantics = [#tpu.dimension_semantics<parallel>, #tpu.dimension_semantics<parallel>], iteration_bounds = array<i64: 2, 5>, scalar_prefetch = 0 : i64, scratch_operands = 0 : i64, tpu.core_type = #tpu.core_type<tc>, window_params = [{transform_indices = @transform_0, window_bounds = array<i64: 128, 128>}, {transform_indices = @transform_1, window_bounds = array<i64: 128, 256>}, {transform_indices = @transform_2, window_bounds = array<i64: 1, 256>}, {transform_indices = @transform_3, window_bounds = array<i64: 128, 256>}]} {
    %c0 = arith.constant 0 : index
    %c0_0 = arith.constant 0 : index
    %0 = vector.load %arg2[%c0, %c0_0] : memref<128x128xbf16, #tpu.memory_space<vmem>>, vector<128x128xbf16>
    %c0_1 = arith.constant 0 : index
    %c0_2 = arith.constant 0 : index
    %1 = vector.load %arg3[%c0_1, %c0_2] : memref<128x256xbf16, #tpu.memory_space<vmem>>, vector<128x256xbf16>
    %cst = arith.constant dense<0.000000e+00> : vector<128x256xf32>
    %2 = tpu.matmul %0, %1, %cst {dimension_numbers = #tpu.dot_dimension_numbers<[1], [0], [0], [1], [0, 0, 1, 1], [], []>} : vector<128x128xbf16>, vector<128x256xbf16>, vector<128x256xf32> -> vector<128x256xf32>
    %c0_3 = arith.constant 0 : index
    %c0_4 = arith.constant 0 : index
    %3 = vector.load %arg4[%c0_3, %c0_4] : memref<1x256xf32, #tpu.memory_space<vmem>>, vector<1x256xf32>
    %4 = vector.broadcast %3 : vector<1x256xf32> to vector<128x256xf32>
    %5 = arith.addf %2, %4 : vector<128x256xf32>
    %6 = arith.truncf %5 : vector<128x256xf32> to vector<128x256xbf16>
    %c0_5 = arith.constant 0 : index
    %c0_6 = arith.constant 0 : index
    %7 = vector.load %arg5[%c0_5, %c0_6] : memref<128x256xbf16, #tpu.memory_space<vmem>>, vector<128x256xbf16>
    tpu.vector_store %arg5[%c0_5, %c0_6], %6 {strides = array<i32>} : memref<128x256xbf16, #tpu.memory_space<vmem>>, vector<128x256xbf16>,
    return
  }
  func.func @transform_0(%arg0: i32, %arg1: i32) -> (i32, i32) {
    %c0_i32 = arith.constant 0 : i32
    %c0_i32_0 = arith.constant 0 : i32
    return %arg0, %c0_i32 : i32, i32
  }
  func.func @transform_1(%arg0: i32, %arg1: i32) -> (i32, i32) {
    %c0_i32 = arith.constant 0 : i32
    %c0_i32_0 = arith.constant 0 : i32
    return %c0_i32, %arg1 : i32, i32
  }
  func.func @transform_2(%arg0: i32, %arg1: i32) -> (i32, i32) {
    %c0_i32 = arith.constant 0 : i32
    %c0_i32_0 = arith.constant 0 : i32
    return %c0_i32, %arg1 : i32, i32
  }
  func.func @transform_3(%arg0: i32, %arg1: i32) -> (i32, i32) {
    %c0_i32 = arith.constant 0 : i32
    return %arg0, %arg1 : i32, i32
  }
}

</mosaic_0001>

<llo_original>
// kernel: tpu_custom_call.1
$region0: #{tpu_custom_call.1}
  #allocation0 [shape = 'u32[]', space=smem, size = 0x4, offset = 0x4, fixed_abs, tag = 'smem constant byte address 0x4 - core index']
  #allocation1 [shape = 'u32[144,128]{1,0:T(1,128)}', space=vmem, size = 0x12000, scoped, tag = 'internal scratch']
  %s0 = inlined_call_operand.hbm [shape: bf16[256,128], index: 0, kind: input, shape index: {}]
  %s1 = inlined_call_operand.hbm [shape: bf16[128,1280], index: 1, kind: input, shape index: {}]
  %s2 = inlined_call_operand.hbm [shape: f32[1,1280], index: 2, kind: input, shape index: {}]
  %s3 = inlined_call_operand.hbm [shape: bf16[256,1280], index: 3, kind: output, shape index: {}]
  %s4 = sld [smem:[#allocation0]]
  $region57: #{tpu_custom_call.1} parent=0
    _
  %s6 = ssub.s32 1, %s4
  %s7 = scalar_select 0, %s6, %s4
  $region1: #{tpu_custom_call.1} parent=0
    #allocation2 [shape = 'u8[65536]{0}', space=vmem, size = 0x10000, scoped, tag = 'input window, operand 0']
    #allocation3 [shape = 's32[2]{0}', space=sflag, size = 0x8, scoped, tag = 'scoped memory for tpu_custom_call.1']
    #allocation4 [shape = 's32[2]{0}', space=sflag, size = 0x8, scoped, tag = 'scoped memory for tpu_custom_call.1']
    #allocation5 [shape = 'u8[131072]{0}', space=vmem, size = 0x20000, scoped, tag = 'input window, operand 1']
    #allocation6 [shape = 's32[2]{0}', space=sflag, size = 0x8, scoped, tag = 'scoped memory for tpu_custom_call.1']
    #allocation7 [shape = 'u8[2048]{0}', space=vmem, size = 0x800, scoped, tag = 'input window, operand 2']
    #allocation8 [shape = 'u8[131072]{0}', space=vmem, size = 0x20000, scoped, tag = 'output window, operand 0']
    %8 = vsyncpa [#allocation3], 0
    %s9 = scalar_lea.sflag [#allocation3], 1
    %10 = vsyncpa %s9, 0
    %11 = vsyncpa [#allocation6], 0
    %s12 = scalar_lea.sflag [#allocation6], 1
    %13 = vsyncpa %s12, 0
    %14 = vsyncpa [#allocation4], 0
    %s15 = scalar_lea.sflag [#allocation4], 1
    %16 = vsyncpa %s15, 0
    loop: start=0, step=1, limit=12
    $region2: #{tpu_custom_call.1} parent=1 // loop_pre_header
      _
    $region3: #{tpu_custom_call.1} parent=1 // loop_header
      %s18 = sphi 0, %s22
      %p19 = scmp.ge.s32.totalorder %s18, 12
      %s25 = sphi 0, %s37
      %s26 = sphi 0, %s33
      %s27 = sphi 0, %s25
      %s28 = sphi 0, %s26
      %s29 = sphi 0, %s27
      %s30 = sphi 0, %s28
      %s40 = sphi 0, %s42
      %s43 = sphi 0, %s40
      %s44 = sphi 0, %s43
      %s60 = sphi 0, %s44
      %s66 = sphi 0, %s68
      %s69 = sphi 0, %s66
      %s70 = sphi 0, %s69
      %s86 = sphi 0, %s70
      %s92 = sphi 0, %s94
      %s95 = sphi 0, %s92
      %s96 = sphi 0, %s95
      %s112 = sphi 0, %s96
      %s120 = sphi 0, %s122
      %s123 = sphi 0, %s120
      %s124 = sphi 0, %s123
      %s140 = sphi 0, %s124
    $region4: #{tpu_custom_call.1} parent=1 // loop_header_branch
      %21 = sbr.rel (%p19) target = $region8
    $region5: #{tpu_custom_call.1} parent=1 // loop_body
      %s23 = ssub.s32 %s18, 1
      %s24 = ssub.s32 %s18, 2
      %s31 = sadd.s32 1, %s26
      %p32 = scmp.ge.s32.totalorder %s31, 5
      %s33 = scalar_select %p32, 0, %s31
      %s34 = sadd.s32 1, %s25
      %s35 = scalar_select %p32, %s34, %s25
      %p36 = scmp.ge.s32.totalorder %s35, 2
      %s37 = scalar_select %p36, 0, %s35
      %s38 = ssub.s32 %s25, %s37
      %p39 = scmp.eq.s32.totalorder %s38, 0
      %s41 = sadd.s32 %s40, 1
      %s42 = scalar_select %p39, %s40, %s41
      %p45 = pneg %p39
      %p46 = scmp.eq.s32.totalorder %s18, 9
      %p47 = por %p45, %p46
      %p48 = scmp.ne.s32.totalorder %s40, %s43
      %p49 = scmp.eq.s32.totalorder %s18, 0
      %p50 = por %p48, %p49
      %p51 = scmp.ne.s32.totalorder %s40, %s43
      %p52 = scmp.eq.s32.totalorder %s23, 9
      %p53 = por %p51, %p52
      %p54 = scmp.ne.s32.totalorder %s43, %s44
      %p55 = scmp.eq.s32.totalorder %s23, 0
      %p56 = por %p54, %p55
      %p57 = scmp.ne.s32.totalorder %s43, %s44
      %p58 = scmp.eq.s32.totalorder %s24, 9
      %p59 = por %p57, %p58
      %p61 = scmp.ne.s32.totalorder %s44, %s60
      %p62 = scmp.eq.s32.totalorder %s24, 0
      %p63 = por %p61, %p62
      %s64 = ssub.s32 %s26, %s33
      %p65 = scmp.eq.s32.totalorder %s64, 0
      %s67 = sadd.s32 %s66, 1
      %s68 = scalar_select %p65, %s66, %s67
      %p71 = pneg %p65
      %p72 = scmp.eq.s32.totalorder %s18, 9
      %p73 = por %p71, %p72
      %p74 = scmp.ne.s32.totalorder %s66, %s69
      %p75 = scmp.eq.s32.totalorder %s18, 0
      %p76 = por %p74, %p75
      %p77 = scmp.ne.s32.totalorder %s66, %s69
      %p78 = scmp.eq.s32.totalorder %s23, 9
      %p79 = por %p77, %p78
      %p80 = scmp.ne.s32.totalorder %s69, %s70
      %p81 = scmp.eq.s32.totalorder %s23, 0
      %p82 = por %p80, %p81
      %p83 = scmp.ne.s32.totalorder %s69, %s70
      %p84 = scmp.eq.s32.totalorder %s24, 9
      %p85 = por %p83, %p84
      %p87 = scmp.ne.s32.totalorder %s70, %s86
      %p88 = scmp.eq.s32.totalorder %s24, 0
      %p89 = por %p87, %p88
      %s90 = ssub.s32 %s26, %s33
      %p91 = scmp.eq.s32.totalorder %s90, 0
      %s93 = sadd.s32 %s92, 1
      %s94 = scalar_select %p91, %s92, %s93
      %p97 = pneg %p91
      %p98 = scmp.eq.s32.totalorder %s18, 9
      %p99 = por %p97, %p98
      %p100 = scmp.ne.s32.totalorder %s92, %s95
      %p101 = scmp.eq.s32.totalorder %s18, 0
      %p102 = por %p100, %p101
      %p103 = scmp.ne.s32.totalorder %s92, %s95
      %p104 = scmp.eq.s32.totalorder %s23, 9
      %p105 = por %p103, %p104
      %p106 = scmp.ne.s32.totalorder %s95, %s96
      %p107 = scmp.eq.s32.totalorder %s23, 0
      %p108 = por %p106, %p107
      %p109 = scmp.ne.s32.totalorder %s95, %s96
      %p110 = scmp.eq.s32.totalorder %s24, 9
      %p111 = por %p109, %p110
      %p113 = scmp.ne.s32.totalorder %s96, %s112
      %p114 = scmp.eq.s32.totalorder %s24, 0
      %p115 = por %p113, %p114
      %s116 = ssub.s32 %s25, %s37
      %s117 = ssub.s32 %s26, %s33
      %s118 = sor.u32 %s116, %s117
      %p119 = scmp.eq.s32.totalorder %s118, 0
      %s121 = sadd.s32 %s120, 1
      %s122 = scalar_select %p119, %s120, %s121
      %p125 = pneg %p119
      %p126 = scmp.eq.s32.totalorder %s18, 9
      %p127 = por %p125, %p126
      %p128 = scmp.ne.s32.totalorder %s120, %s123
      %p129 = scmp.eq.s32.totalorder %s18, 0
      %p130 = por %p128, %p129
      %p131 = scmp.ne.s32.totalorder %s120, %s123
      %p132 = scmp.eq.s32.totalorder %s23, 9
      %p133 = por %p131, %p132
      %p134 = scmp.ne.s32.totalorder %s123, %s124
      %p135 = scmp.eq.s32.totalorder %s23, 0
      %p136 = por %p134, %p135
      %p137 = scmp.ne.s32.totalorder %s123, %s124
      %p138 = scmp.eq.s32.totalorder %s24, 9
      %p139 = por %p137, %p138
      %p141 = scmp.ne.s32.totalorder %s124, %s140
      %p142 = scmp.eq.s32.totalorder %s24, 0
      %p143 = por %p141, %p142
      %p144 = scmp.le.s32.totalorder 1, %s18
      %p145 = scmp.lt.s32.totalorder %s18, 11
      %p146 = pnand %p144, %p145
      %p147 = pneg %p146
      // Predicated region
      $region9: #{tpu_custom_call.1} parent=5 // pred_check
        _
      $region10: #{tpu_custom_call.1} parent=5 // pred_check_branch
        %149 = sbr.rel (%p146) target = $region12
      $region11: #{tpu_custom_call.1} parent=5 // pred_region
        %s150 = ssub.s32 %s18, 1
      $region12: #{tpu_custom_call.1} parent=5 // pred_fallthru
        _
      %p151 = scmp.lt.s32.totalorder %s18, 10
      // Predicated region
      $region13: #{tpu_custom_call.1} parent=5 // pred_check
        %p152 = pneg %p151
      $region14: #{tpu_custom_call.1} parent=5 // pred_check_branch
        %154 = sbr.rel (%p152) target = $region16
      $region15: #{tpu_custom_call.1} parent=5 // pred_region
        // Predicated region
        $region17: #{tpu_custom_call.1} parent=15 // pred_check
          %p155 = pneg %p50
        $region18: #{tpu_custom_call.1} parent=15 // pred_check_branch
          %157 = sbr.rel (%p155) target = $region20
        $region19: #{tpu_custom_call.1} parent=15 // pred_region
          %s158 = sand.u32 %s40, 1
          %s159 = scalar_lea.sflag [#allocation3], %s158
          %s160 = sand.u32 %s40, 1
          %s161 = smul.addr %s160, 64
          %s162 = scalar_lea.vmem [#allocation2], %s161
          %s163 = smul.u32 16, %s25
          %s165 = ssub.s32 1024, 1024
          %166 = vsyncadd %s159, %s165
          %s167 = smul.addr %s163, 64
          %s168 = scalar_lea.hbm %s0, %s167
          %s169 = sshll.u32 %s162, 4
          %s170 = int_to_ptr.vmem [resolvable:$true] %s169
          %175 = dma.hbm_to_vmem [thread:$0]  %s168, 1024, %s170, %s159, 64, 64, 4
        $region20: #{tpu_custom_call.1} parent=15 // pred_fallthru
          _
        // Predicated region
        $region21: #{tpu_custom_call.1} parent=15 // pred_check
          %p176 = pneg %p76
        $region22: #{tpu_custom_call.1} parent=15 // pred_check_branch
          %178 = sbr.rel (%p176) target = $region24
        $region23: #{tpu_custom_call.1} parent=15 // pred_region
          %s179 = sand.u32 %s18, 1
          %s180 = scalar_lea.sflag [#allocation6], %s179
          %s181 = sand.u32 %s66, 1
          %s182 = smul.addr %s181, 128
          %s183 = scalar_lea.vmem [#allocation5], %s182
          %s184 = smul.u32 2, %s26
          %s186 = ssub.s32 2048, 2048
          %187 = vsyncadd %s180, %s186
          %s188 = smul.addr %s184, 64
          %s189 = scalar_lea.hbm %s1, %s188
          %s190 = sshll.u32 %s183, 4
          %s191 = int_to_ptr.vmem [resolvable:$true] %s190
          %196 = dma.hbm_to_vmem [thread:$0]  %s189, 2048, %s191, %s180, 640, 128, 8
        $region24: #{tpu_custom_call.1} parent=15 // pred_fallthru
          _
        // Predicated region
        $region25: #{tpu_custom_call.1} parent=15 // pred_check
          %p197 = pneg %p102
        $region26: #{tpu_custom_call.1} parent=15 // pred_check_branch
          %199 = sbr.rel (%p197) target = $region28
        $region27: #{tpu_custom_call.1} parent=15 // pred_region
          %s200 = sand.u32 %s18, 1
          %s201 = scalar_lea.sflag [#allocation6], %s200
          %s202 = sand.u32 %s92, 1
          %s203 = smul.addr %s202, 2
          %s204 = scalar_lea.vmem [#allocation7], %s203
          %s205 = smul.u32 2, %s26
          %s207 = ssub.s32 32, 32
          %208 = vsyncadd %s201, %s207
          %s209 = smul.addr %s205, 16
          %s210 = scalar_lea.hbm %s2, %s209
          %s212 = sshll.u32 %s204, 4
          %s213 = int_to_ptr.vmem [resolvable:$true] %s212
          %215 = dma.hbm_to_vmem [thread:$0]  %s210, 32, %s213, %s201
        $region28: #{tpu_custom_call.1} parent=15 // pred_fallthru
          _
      $region16: #{tpu_custom_call.1} parent=5 // pred_fallthru
        _
      %p216 = scmp.le.s32.totalorder 1, %s18
      %p217 = scmp.lt.s32.totalorder %s18, 11
      %p218 = pnand %p216, %p217
      %p219 = pneg %p218
      // Predicated region
      $region29: #{tpu_custom_call.1} parent=5 // pred_check
        _
      $region30: #{tpu_custom_call.1} parent=5 // pred_check_branch
        %221 = sbr.rel (%p218) target = $region32
      $region31: #{tpu_custom_call.1} parent=5 // pred_region
        %s222 = ssub.s32 %s18, 1
        %s223 = sand.u32 %s43, 1
        %s224 = scalar_lea.sflag [#allocation3], %s223
        %s225 = sand.u32 %s43, 1
        %s226 = smul.addr %s225, 64
        %s227 = scalar_lea.vmem [#allocation2], %s226
        // Predicated region
        $region33: #{tpu_custom_call.1} parent=31 // pred_check
          %p228 = pneg %p56
        $region34: #{tpu_custom_call.1} parent=31 // pred_check_branch
          %230 = sbr.rel (%p228) target = $region36
        $region35: #{tpu_custom_call.1} parent=31 // pred_region
          %231 = dma.done %s224, 1024
        $region36: #{tpu_custom_call.1} parent=31 // pred_fallthru
          _
        %s232 = sand.u32 %s23, 1
        %s233 = scalar_lea.sflag [#allocation6], %s232
        %s234 = sand.u32 %s69, 1
        %s235 = smul.addr %s234, 128
        %s236 = scalar_lea.vmem [#allocation5], %s235
        // Predicated region
        $region37: #{tpu_custom_call.1} parent=31 // pred_check
          %p237 = pneg %p82
        $region38: #{tpu_custom_call.1} parent=31 // pred_check_branch
          %239 = sbr.rel (%p237) target = $region40
        $region39: #{tpu_custom_call.1} parent=31 // pred_region
          %240 = dma.done %s233, 2048
        $region40: #{tpu_custom_call.1} parent=31 // pred_fallthru
          _
        %s241 = sand.u32 %s23, 1
        %s242 = scalar_lea.sflag [#allocation6], %s241
        %s243 = sand.u32 %s95, 1
        %s244 = smul.addr %s243, 2
        %s245 = scalar_lea.vmem [#allocation7], %s244
        // Predicated region
        $region41: #{tpu_custom_call.1} parent=31 // pred_check
          %p246 = pneg %p108
        $region42: #{tpu_custom_call.1} parent=31 // pred_check_branch
          %248 = sbr.rel (%p246) target = $region44
        $region43: #{tpu_custom_call.1} parent=31 // pred_region
          %249 = dma.done %s242, 32
        $region44: #{tpu_custom_call.1} parent=31 // pred_fallthru
          _
        %s250 = sand.u32 %s43, 1
        %s251 = scalar_lea.sflag [#allocation3], %s250
        %s252 = sand.u32 %s43, 1
        %s253 = smul.addr %s252, 64
        %s254 = scalar_lea.vmem [#allocation2], %s253
        %p255 = pneg %p56
        %p256 = pneg %p53
        %s257 = sand.u32 %s23, 1
        %s258 = scalar_lea.sflag [#allocation6], %s257
        %s259 = sand.u32 %s69, 1
        %s260 = smul.addr %s259, 128
        %s261 = scalar_lea.vmem [#allocation5], %s260
        %p262 = pneg %p82
        %p263 = pneg %p79
        %s264 = sand.u32 %s23, 1
        %s265 = scalar_lea.sflag [#allocation6], %s264
        %s266 = sand.u32 %s95, 1
        %s267 = smul.addr %s266, 2
        %s268 = scalar_lea.vmem [#allocation7], %s267
        %p269 = pneg %p108
        %p270 = pneg %p105
        %p271 = pneg %p136
        %p272 = pneg %p133
        %s273 = sand.u32 %s123, 1
        %s274 = scalar_lea.sflag [#allocation4], %s273
        %s275 = sand.u32 %s123, 1
        %s276 = smul.addr %s275, 128
        %s277 = scalar_lea.vmem [#allocation8], %s276
        %s278 = smul.u32 16, %s27
        %s279 = smul.u32 2, %s28
        %s280 = smul.u32 2, %s28
        %s281 = smul.u32 16, %s27
        %s282 = smul.u32 2, %s28
        %v284 = vld [vmem:[%s227] sm:$0xf]
        %v285 = vld [vmem:[%s227 + $0x4] sm:$0xf]
        %v286 = vld [vmem:[%s227 + $0x8] sm:$0xf]
        %v287 = vld [vmem:[%s227 + $0xc] sm:$0xf]
        %v288 = vld [vmem:[%s227 + $0x10] sm:$0xf]
        %v289 = vld [vmem:[%s227 + $0x14] sm:$0xf]
        %v290 = vld [vmem:[%s227 + $0x18] sm:$0xf]
        %v291 = vld [vmem:[%s227 + $0x1c] sm:$0xf]
        %v292 = vld [vmem:[%s227 + $0x20] sm:$0xf]
        %v293 = vld [vmem:[%s227 + $0x24] sm:$0xf]
        %v294 = vld [vmem:[%s227 + $0x28] sm:$0xf]
        %v295 = vld [vmem:[%s227 + $0x2c] sm:$0xf]
        %v296 = vld [vmem:[%s227 + $0x30] sm:$0xf]
        %v297 = vld [vmem:[%s227 + $0x34] sm:$0xf]
        %v298 = vld [vmem:[%s227 + $0x38] sm:$0xf]
        %v299 = vld [vmem:[%s227 + $0x3c] sm:$0xf]
        %v300 = vld [vmem:[%s236] sm:$0xff]
        %v301 = vld [vmem:[%s236 + $0x8] sm:$0xff]
        %v302 = vld [vmem:[%s236 + $0x10] sm:$0xff]
        %v303 = vld [vmem:[%s236 + $0x18] sm:$0xff]
        %v304 = vld [vmem:[%s236 + $0x20] sm:$0xff]
        %v305 = vld [vmem:[%s236 + $0x28] sm:$0xff]
        %v306 = vld [vmem:[%s236 + $0x30] sm:$0xff]
        %v307 = vld [vmem:[%s236 + $0x38] sm:$0xff]
        %v308 = vld [vmem:[%s236 + $0x40] sm:$0xff]
        %v309 = vld [vmem:[%s236 + $0x48] sm:$0xff]
        %v310 = vld [vmem:[%s236 + $0x50] sm:$0xff]
        %v311 = vld [vmem:[%s236 + $0x58] sm:$0xff]
        %v312 = vld [vmem:[%s236 + $0x60] sm:$0xff]
        %v313 = vld [vmem:[%s236 + $0x68] sm:$0xff]
        %v314 = vld [vmem:[%s236 + $0x70] sm:$0xff]
        %v315 = vld [vmem:[%s236 + $0x78] sm:$0xff]
        %v316 = vld [vmem:[%s245] sm:$0x3]
        %v318 = vlaneseq
        %v319 = vshrl.u32 %v318, 7
        %v320 = vsub.s32 0, %v319
        %v321 = vrot.slane %v316, %v320
        %v322 = vlaneseq
        %v323 = vshrl.u32 %v322, 7
        %v324 = vsub.s32 1, %v323
        %v325 = vrot.slane %v316, %v324
        %v344 = vunpack.c.l.b16 %v284
        %v345 = vunpack.c.l.b16 %v285
        %v346 = vunpack.c.l.b16 %v286
        %v347 = vunpack.c.l.b16 %v287
        %v348 = vunpack.c.l.b16 %v288
        %v349 = vunpack.c.l.b16 %v289
        %v350 = vunpack.c.l.b16 %v290
        %v351 = vunpack.c.l.b16 %v291
        %v352 = vunpack.c.l.b16 %v292
        %v353 = vunpack.c.l.b16 %v293
        %v354 = vunpack.c.l.b16 %v294
        %v355 = vunpack.c.l.b16 %v295
        %v356 = vunpack.c.l.b16 %v296
        %v357 = vunpack.c.l.b16 %v297
        %v358 = vunpack.c.l.b16 %v298
        %v359 = vunpack.c.l.b16 %v299
        %v360 = vpack.c.b16 %v345, %v344
        %v361 = vpack.c.b16 %v347, %v346
        %v362 = vpack.c.b16 %v349, %v348
        %v363 = vpack.c.b16 %v351, %v350
        %v364 = vpack.c.b16 %v353, %v352
        %v365 = vpack.c.b16 %v355, %v354
        %v366 = vpack.c.b16 %v357, %v356
        %v367 = vpack.c.b16 %v359, %v358
        %v392 = vunpack.c.l.b16 %v300
        %v393 = vunpack.c.h.b16 %v300
        %v394 = vunpack.c.l.b16 %v301
        %v395 = vunpack.c.h.b16 %v301
        %v396 = vunpack.c.l.b16 %v302
        %v397 = vunpack.c.h.b16 %v302
        %v398 = vunpack.c.l.b16 %v303
        %v399 = vunpack.c.h.b16 %v303
        %v400 = vunpack.c.l.b16 %v304
        %v401 = vunpack.c.h.b16 %v304
        %v402 = vunpack.c.l.b16 %v305
        %v403 = vunpack.c.h.b16 %v305
        %v404 = vunpack.c.l.b16 %v306
        %v405 = vunpack.c.h.b16 %v306
        %v406 = vunpack.c.l.b16 %v307
        %v407 = vunpack.c.h.b16 %v307
        %v408 = vunpack.c.l.b16 %v308
        %v409 = vunpack.c.h.b16 %v308
        %v410 = vunpack.c.l.b16 %v309
        %v411 = vunpack.c.h.b16 %v309
        %v412 = vunpack.c.l.b16 %v310
        %v413 = vunpack.c.h.b16 %v310
        %v414 = vunpack.c.l.b16 %v311
        %v415 = vunpack.c.h.b16 %v311
        %v416 = vunpack.c.l.b16 %v312
        %v417 = vunpack.c.h.b16 %v312
        %v418 = vunpack.c.l.b16 %v313
        %v419 = vunpack.c.h.b16 %v313
        %v420 = vunpack.c.l.b16 %v314
        %v421 = vunpack.c.h.b16 %v314
        %v422 = vunpack.c.l.b16 %v315
        %v423 = vunpack.c.h.b16 %v315
        %v424 = vpack.c.b16 %v394, %v392
        %v425 = vpack.c.b16 %v395, %v393
        %v426 = vpack.c.b16 %v398, %v396
        %v427 = vpack.c.b16 %v399, %v397
        %v428 = vpack.c.b16 %v402, %v400
        %v429 = vpack.c.b16 %v403, %v401
        %v430 = vpack.c.b16 %v406, %v404
        %v431 = vpack.c.b16 %v407, %v405
        %v432 = vpack.c.b16 %v410, %v408
        %v433 = vpack.c.b16 %v411, %v409
        %v434 = vpack.c.b16 %v414, %v412
        %v435 = vpack.c.b16 %v415, %v413
        %v436 = vpack.c.b16 %v418, %v416
        %v437 = vpack.c.b16 %v419, %v417
        %v438 = vpack.c.b16 %v422, %v420
        %v439 = vpack.c.b16 %v423, %v421
        %456 = vmatprep.subr.bf16.mxu0 %v425
        %457 = vmatpush1.bf16.msra.mxu0 %v424
        %458 = vmatprep.subr.bf16.mxu0 %v427
        %459 = vmatpush1.bf16.msra.mxu0 %v426
        %460 = vmatprep.subr.bf16.mxu0 %v429
        %461 = vmatpush1.bf16.msra.mxu0 %v428
        %462 = vmatprep.subr.bf16.mxu0 %v431
        %463 = vmatpush1.bf16.msra.mxu0 %v430
        %464 = vmatprep.subr.bf16.mxu0 %v433
        %465 = vmatpush1.bf16.msra.mxu0 %v432
        %466 = vmatprep.subr.bf16.mxu0 %v435
        %467 = vmatpush1.bf16.msra.mxu0 %v434
        %468 = vmatprep.subr.bf16.mxu0 %v437
        %469 = vmatpush1.bf16.msra.mxu0 %v436
        %470 = vmatprep.subr.bf16.mxu0 %v439
        %471 = vmatpush1.bf16.msra.mxu0 %v438
        %472 = vmatprep.subr.bf16.mxu0 0
        %473 = vmatpush1.bf16.msra.mxu0 0
        %474 = vmatprep.subr.bf16.mxu0 0
        %475 = vmatpush1.bf16.msra.mxu0 0
        %476 = vmatprep.subr.bf16.mxu0 0
        %477 = vmatpush1.bf16.msra.mxu0 0
        %478 = vmatprep.subr.bf16.mxu0 0
        %479 = vmatpush1.bf16.msra.mxu0 0
        %480 = vmatprep.subr.bf16.mxu0 0
        %481 = vmatpush1.bf16.msra.mxu0 0
        %482 = vmatprep.subr.bf16.mxu0 0
        %483 = vmatpush1.bf16.msra.mxu0 0
        %484 = vmatprep.subr.bf16.mxu0 0
        %485 = vmatpush1.bf16.msra.mxu0 0
        %486 = vmatprep.subr.bf16.mxu0 0
        %487 = vmatpush1.bf16.msra.mxu0 0
        %488 = vmatprep.mubr.bf16.mxu0 0
        %489 = vmatmul.mubr.bf16.gmra.mrb[0].mxu0 %v360
        %v490 = vpop.f32.mrb[0].mxu0
        %v491 = vadd.f32 %v321, %v490
        %v492 = vpop.f32.mrb[0].mxu0
        %v493 = vadd.f32 %v325, %v492
        %v494 = vpop.f32.mrb[0].mxu0
        %v495 = vadd.f32 %v321, %v494
        %v496 = vpop.f32.mrb[0].mxu0
        %v497 = vadd.f32 %v325, %v496
        %498 = vmatprep.mubr.bf16.mxu0 0
        %499 = vmatmul.mubr.bf16.gmra.mrb[0].mxu0 %v361
        %v500 = vpop.f32.mrb[0].mxu0
        %v501 = vadd.f32 %v321, %v500
        %v502 = vpop.f32.mrb[0].mxu0
        %v503 = vadd.f32 %v325, %v502
        %v504 = vpop.f32.mrb[0].mxu0
        %v505 = vadd.f32 %v321, %v504
        %v506 = vpop.f32.mrb[0].mxu0
        %v507 = vadd.f32 %v325, %v506
        %508 = vmatprep.mubr.bf16.mxu0 0
        %509 = vmatmul.mubr.bf16.gmra.mrb[0].mxu0 %v362
        %v510 = vpop.f32.mrb[0].mxu0
        %v511 = vadd.f32 %v321, %v510
        %v512 = vpop.f32.mrb[0].mxu0
        %v513 = vadd.f32 %v325, %v512
        %v514 = vpop.f32.mrb[0].mxu0
        %v515 = vadd.f32 %v321, %v514
        %v516 = vpop.f32.mrb[0].mxu0
        %v517 = vadd.f32 %v325, %v516
        %518 = vmatprep.mubr.bf16.mxu0 0
        %519 = vmatmul.mubr.bf16.gmra.mrb[0].mxu0 %v363
        %v520 = vpop.f32.mrb[0].mxu0
        %v521 = vadd.f32 %v321, %v520
        %v522 = vpop.f32.mrb[0].mxu0
        %v523 = vadd.f32 %v325, %v522
        %v524 = vpop.f32.mrb[0].mxu0
        %v525 = vadd.f32 %v321, %v524
        %v526 = vpop.f32.mrb[0].mxu0
        %v527 = vadd.f32 %v325, %v526
        %528 = vmatprep.mubr.bf16.mxu0 0
        %529 = vmatmul.mubr.bf16.gmra.mrb[0].mxu0 %v364
        %v530 = vpop.f32.mrb[0].mxu0
        %v531 = vadd.f32 %v321, %v530
        %v532 = vpop.f32.mrb[0].mxu0
        %v533 = vadd.f32 %v325, %v532
        %v534 = vpop.f32.mrb[0].mxu0
        %v535 = vadd.f32 %v321, %v534
        %v536 = vpop.f32.mrb[0].mxu0
        %v537 = vadd.f32 %v325, %v536
        %538 = vmatprep.mubr.bf16.mxu0 0
        %539 = vmatmul.mubr.bf16.gmra.mrb[0].mxu0 %v365
        %v540 = vpop.f32.mrb[0].mxu0
        %v541 = vadd.f32 %v321, %v540
        %v542 = vpop.f32.mrb[0].mxu0
        %v543 = vadd.f32 %v325, %v542
        %v544 = vpop.f32.mrb[0].mxu0
        %v545 = vadd.f32 %v321, %v544
        %v546 = vpop.f32.mrb[0].mxu0
        %v547 = vadd.f32 %v325, %v546
        %548 = vmatprep.mubr.bf16.mxu0 0
        %549 = vmatmul.mubr.bf16.gmra.mrb[0].mxu0 %v366
        %v550 = vpop.f32.mrb[0].mxu0
        %v551 = vadd.f32 %v321, %v550
        %v552 = vpop.f32.mrb[0].mxu0
        %v553 = vadd.f32 %v325, %v552
        %v554 = vpop.f32.mrb[0].mxu0
        %v555 = vadd.f32 %v321, %v554
        %v556 = vpop.f32.mrb[0].mxu0
        %v557 = vadd.f32 %v325, %v556
        %558 = vmatprep.mubr.bf16.mxu0 0
        %559 = vmatmul.mubr.bf16.gmra.mrb[0].mxu0 %v367
        %v560 = vpop.f32.mrb[0].mxu0
        %v561 = vadd.f32 %v321, %v560
        %v562 = vpop.f32.mrb[0].mxu0
        %v563 = vadd.f32 %v325, %v562
        %v564 = vpop.f32.mrb[0].mxu0
        %v565 = vadd.f32 %v321, %v564
        %v566 = vpop.f32.mrb[0].mxu0
        %v567 = vadd.f32 %v325, %v566
        %568 = vdwg.mxu0
        %v569 = vpack.c.bf16 %v495, %v491
        %v570 = vpack.c.bf16 %v497, %v493
        %v571 = vpack.c.bf16 %v505, %v501
        %v572 = vpack.c.bf16 %v507, %v503
        %v573 = vpack.c.bf16 %v515, %v511
        %v574 = vpack.c.bf16 %v517, %v513
        %v575 = vpack.c.bf16 %v525, %v521
        %v576 = vpack.c.bf16 %v527, %v523
        %v577 = vpack.c.bf16 %v535, %v531
        %v578 = vpack.c.bf16 %v537, %v533
        %v579 = vpack.c.bf16 %v545, %v541
        %v580 = vpack.c.bf16 %v547, %v543
        %v581 = vpack.c.bf16 %v555, %v551
        %v582 = vpack.c.bf16 %v557, %v553
        %v583 = vpack.c.bf16 %v565, %v561
        %v584 = vpack.c.bf16 %v567, %v563
        %v601 = vunpack.c.l.b16 %v569
        %v602 = vunpack.c.l.b16 %v570
        %v603 = vunpack.c.h.b16 %v569
        %v604 = vunpack.c.h.b16 %v570
        %v605 = vunpack.c.l.b16 %v571
        %v606 = vunpack.c.l.b16 %v572
        %v607 = vunpack.c.h.b16 %v571
        %v608 = vunpack.c.h.b16 %v572
        %v609 = vunpack.c.l.b16 %v573
        %v610 = vunpack.c.l.b16 %v574
        %v611 = vunpack.c.h.b16 %v573
        %v612 = vunpack.c.h.b16 %v574
        %v613 = vunpack.c.l.b16 %v575
        %v614 = vunpack.c.l.b16 %v576
        %v615 = vunpack.c.h.b16 %v575
        %v616 = vunpack.c.h.b16 %v576
        %v617 = vunpack.c.l.b16 %v577
        %v618 = vunpack.c.l.b16 %v578
        %v619 = vunpack.c.h.b16 %v577
        %v620 = vunpack.c.h.b16 %v578
        %v621 = vunpack.c.l.b16 %v579
        %v622 = vunpack.c.l.b16 %v580
        %v623 = vunpack.c.h.b16 %v579
        %v624 = vunpack.c.h.b16 %v580
        %v625 = vunpack.c.l.b16 %v581
        %v626 = vunpack.c.l.b16 %v582
        %v627 = vunpack.c.h.b16 %v581
        %v628 = vunpack.c.h.b16 %v582
        %v629 = vunpack.c.l.b16 %v583
        %v630 = vunpack.c.l.b16 %v584
        %v631 = vunpack.c.h.b16 %v583
        %v632 = vunpack.c.h.b16 %v584
        %v633 = vpack.c.b16 %v602, %v601
        %v634 = vpack.c.b16 %v604, %v603
        %v635 = vpack.c.b16 %v606, %v605
        %v636 = vpack.c.b16 %v608, %v607
        %v637 = vpack.c.b16 %v610, %v609
        %v638 = vpack.c.b16 %v612, %v611
        %v639 = vpack.c.b16 %v614, %v613
        %v640 = vpack.c.b16 %v616, %v615
        %v641 = vpack.c.b16 %v618, %v617
        %v642 = vpack.c.b16 %v620, %v619
        %v643 = vpack.c.b16 %v622, %v621
        %v644 = vpack.c.b16 %v624, %v623
        %v645 = vpack.c.b16 %v626, %v625
        %v646 = vpack.c.b16 %v628, %v627
        %v647 = vpack.c.b16 %v630, %v629
        %v648 = vpack.c.b16 %v632, %v631
        %665 = vst [vmem:[%s277] sm:$0xff] %v633
        %666 = vst [vmem:[%s277 + $0x8] sm:$0xff] %v634
        %667 = vst [vmem:[%s277 + $0x10] sm:$0xff] %v635
        %668 = vst [vmem:[%s277 + $0x18] sm:$0xff] %v636
        %669 = vst [vmem:[%s277 + $0x20] sm:$0xff] %v637
        %670 = vst [vmem:[%s277 + $0x28] sm:$0xff] %v638
        %671 = vst [vmem:[%s277 + $0x30] sm:$0xff] %v639
        %672 = vst [vmem:[%s277 + $0x38] sm:$0xff] %v640
        %673 = vst [vmem:[%s277 + $0x40] sm:$0xff] %v641
        %674 = vst [vmem:[%s277 + $0x48] sm:$0xff] %v642
        %675 = vst [vmem:[%s277 + $0x50] sm:$0xff] %v643
        %676 = vst [vmem:[%s277 + $0x58] sm:$0xff] %v644
        %677 = vst [vmem:[%s277 + $0x60] sm:$0xff] %v645
        %678 = vst [vmem:[%s277 + $0x68] sm:$0xff] %v646
        %679 = vst [vmem:[%s277 + $0x70] sm:$0xff] %v647
        %680 = vst [vmem:[%s277 + $0x78] sm:$0xff] %v648
        %s681 = sand.u32 %s123, 1
        %s682 = scalar_lea.sflag [#allocation4], %s681
        %s683 = sand.u32 %s123, 1
        %s684 = smul.addr %s683, 128
        %s685 = scalar_lea.vmem [#allocation8], %s684
        // Predicated region
        $region45: #{tpu_custom_call.1} parent=31 // pred_check
          %p686 = pneg %p133
        $region46: #{tpu_custom_call.1} parent=31 // pred_check_branch
          %688 = sbr.rel (%p686) target = $region48
        $region47: #{tpu_custom_call.1} parent=31 // pred_region
          %s689 = smul.u32 16, %s27
          %s690 = smul.u32 2, %s28
          %s692 = ssub.s32 2048, 2048
          %693 = vsyncadd %s682, %s692
          %s694 = smul.addr %s689, 10
          %s695 = sadd.s32 %s690, %s694
          %s696 = smul.addr %s695, 64
          %s697 = scalar_lea.hbm %s3, %s696
          %s698 = sshll.u32 %s685, 4
          %s699 = int_to_ptr.vmem [resolvable:$true] %s698
          %704 = dma.vmem_to_hbm [thread:$0]  %s699, 2048, %s697, %s682, 128, 640, 8
        $region48: #{tpu_custom_call.1} parent=31 // pred_fallthru
          _
      $region32: #{tpu_custom_call.1} parent=5 // pred_fallthru
        _
      %p705 = scmp.le.s32.totalorder 2, %s18
      // Predicated region
      $region49: #{tpu_custom_call.1} parent=5 // pred_check
        %p706 = pneg %p705
      $region50: #{tpu_custom_call.1} parent=5 // pred_check_branch
        %708 = sbr.rel (%p706) target = $region52
      $region51: #{tpu_custom_call.1} parent=5 // pred_region
        %s709 = ssub.s32 %s18, 2
        // Predicated region
        $region53: #{tpu_custom_call.1} parent=51 // pred_check
          %p710 = pneg %p139
        $region54: #{tpu_custom_call.1} parent=51 // pred_check_branch
          %712 = sbr.rel (%p710) target = $region56
        $region55: #{tpu_custom_call.1} parent=51 // pred_region
          %s713 = sand.u32 %s124, 1
          %s714 = scalar_lea.sflag [#allocation4], %s713
          %s715 = sand.u32 %s124, 1
          %s716 = smul.addr %s715, 128
          %s717 = scalar_lea.vmem [#allocation8], %s716
          %718 = dma.done %s714, 2048
        $region56: #{tpu_custom_call.1} parent=51 // pred_fallthru
          _
      $region52: #{tpu_custom_call.1} parent=5 // pred_fallthru
        _
    $region6: #{tpu_custom_call.1} parent=1 // loop_footer
      %s22 = sadd.s32 1, %s18
    $region7: #{tpu_custom_call.1} parent=1 // loop_footer_branch
      %17 = sbr.rel target = $region3
    $region8: #{tpu_custom_call.1} parent=1 // loop_exit
      _
    %719 = vsyncpa [#allocation3], 1
    %s720 = scalar_lea.sflag [#allocation3], 1
    %721 = vsyncpa %s720, 1
    %722 = vsyncpa [#allocation6], 1
    %s723 = scalar_lea.sflag [#allocation6], 1
    %724 = vsyncpa %s723, 1
    %725 = vsyncpa [#allocation4], 1
    %s726 = scalar_lea.sflag [#allocation4], 1
    %727 = vsyncpa %s726, 1

</llo_original>
